<compile_context>
chip_gen: v7x
topology: tpu7x:2x2x1
jax: 0.10.0
libtpu: 0.0.40
codegen_flags: <defaults>
</compile_context>

<pallas_src>
import functools

import jax
import jax.numpy as jnp
from jax.experimental import pallas as pl
from jax.experimental.pallas import tpu as pltpu


def _round_up(x, m):
    return (x + m - 1) // m * m


def _dqn_kernel(x_ref, w_in_ref, b_in_ref, w_h_ref, b_h_ref,
                w_out_ref, b_out_ref, o_ref, *, n_hidden):
    # Input layer: Linear + ReLU (all dims padded to 128 -> full-tile vmatmuls)
    h = jnp.dot(x_ref[...], w_in_ref[...], preferred_element_type=jnp.float32)
    h = jnp.maximum(h + b_in_ref[...], 0.0)

    # Hidden layers: Linear + ReLU (static unroll; n_hidden is a trace-time constant)
    # TODO(synk): for hidden_layers >~ 8 switch to lax.fori_loop / a layer grid axis
    # to bound vreg live ranges.
    for i in range(n_hidden):
        h = jnp.dot(h, w_h_ref[i], preferred_element_type=jnp.float32)
        h = jnp.maximum(h + b_h_ref[i], 0.0)

    # Output layer: Linear (lane-dense, unmasked store)
    out = jnp.dot(h, w_out_ref[...], preferred_element_type=jnp.float32)
    o_ref[...] = (out + b_out_ref[...]).astype(o_ref.dtype)


def deep_q_forward(x, params, *, block_batch=256):
    """x: (batch, input_size) f32.  params from init_params (unpadded)."""
    w_in, b_in, w_h, b_h, w_out, b_out = params
    batch, in_size = x.shape
    hidden_layers = w_h.shape[0]
    hidden_size = w_in.shape[1]
    out_size = w_out.shape[1]

    # --- lane-dense padding: every feature dim up to a multiple of 128 ---
    kp = _round_up(in_size, 128)
    hp = _round_up(hidden_size, 128)
    op = _round_up(out_size, 128)

    # --- batch tiling: pad batch to a multiple of the tile (tile itself 8-aligned) ---
    bp = _round_up(batch, 8)
    tb = min(block_batch, bp)
    bp = _round_up(bp, tb)

    f32 = jnp.float32
    xp = jnp.zeros((bp, kp), x.dtype).at[:batch, :in_size].set(x)
    w_in_p = jnp.zeros((kp, hp), f32).at[:in_size, :hidden_size].set(w_in)
    b_in_p = jnp.zeros((1, hp), f32).at[:, :hidden_size].set(b_in.reshape(1, -1))
    w_out_p = jnp.zeros((hp, op), f32).at[:hidden_size, :out_size].set(w_out)
    b_out_p = jnp.zeros((1, op), f32).at[:, :out_size].set(b_out.reshape(1, -1))

    if hidden_layers > 0:
        w_h_p = jnp.zeros((hidden_layers, hp, hp), f32).at[
            :, :hidden_size, :hidden_size].set(w_h)
        b_h_p = jnp.zeros((hidden_layers, hp), f32).at[:, :hidden_size].set(b_h)
    else:
        # never read (kernel loop bound is n_hidden=0); placeholder keeps shapes legal
        w_h_p = jnp.zeros((1, hp, hp), f32)
        b_h_p = jnp.zeros((1, hp), f32)

    grid = (bp // tb,)
    kernel = functools.partial(_dqn_kernel, n_hidden=hidden_layers)

    out_p = pl.pallas_call(
        kernel,
        out_shape=jax.ShapeDtypeStruct((bp, op), x.dtype),
        grid_spec=pltpu.PrefetchScalarGridSpec(
            num_scalar_prefetch=0,
            grid=grid,
            in_specs=[
                pl.BlockSpec((tb, kp), lambda i: (i, 0)),          # x: streamed per tile
                pl.BlockSpec((kp, hp), lambda i: (0, 0)),          # weights stay resident
                pl.BlockSpec((1, hp), lambda i: (0, 0)),
                pl.BlockSpec(w_h_p.shape, lambda i: (0, 0, 0)),
                pl.BlockSpec(b_h_p.shape, lambda i: (0, 0)),
                pl.BlockSpec((hp, op), lambda i: (0, 0)),
                pl.BlockSpec((1, op), lambda i: (0, 0)),
            ],
            out_specs=pl.BlockSpec((tb, op), lambda i: (i, 0)),    # lane-dense output slab
        ),
        compiler_params=pltpu.CompilerParams(
            dimension_semantics=("parallel",)),                    # 2 TCs on v7x
    )(xp, w_in_p, b_in_p, w_h_p, b_h_p, w_out_p, b_out_p)

    return out_p[:batch, :out_size]


def init_params(key, input_size, hidden_size, output_size, hidden_layers):
    """Xavier-uniform weights, zero biases (matches the PyTorch module __init__).
    Weights stored pre-transposed as (in_features, out_features)."""
    def xavier(k, fan_in, fan_out, shape):
        bound = (6.0 / (fan_in + fan_out)) ** 0.5
        return jax.random.uniform(k, shape, jnp.float32, -bound, bound)

    keys = jax.random.split(key, 2 + max(hidden_layers, 1))
    w_in = xavier(keys[0], input_size, hidden_size, (input_size, hidden_size))
    b_in = jnp.zeros((hidden_size,), jnp.float32)
    if hidden_layers > 0:
        w_h = jnp.stack([
            xavier(keys[1 + i], hidden_size, hidden_size, (hidden_size, hidden_size))
            for i in range(hidden_layers)
        ])
    else:
        w_h = jnp.zeros((0, hidden_size, hidden_size), jnp.float32)
    b_h = jnp.zeros((hidden_layers, hidden_size), jnp.float32)
    w_out = xavier(keys[-1], hidden_size, output_size, (hidden_size, output_size))
    b_out = jnp.zeros((output_size,), jnp.float32)
    return w_in, b_in, w_h, b_h, w_out, b_out


def reference_forward(x, params):
    w_in, b_in, w_h, b_h, w_out, b_out = params
    h = jnp.maximum(x @ w_in + b_in, 0.0)
    for i in range(w_h.shape[0]):
        h = jnp.maximum(h @ w_h[i] + b_h[i], 0.0)
    return h @ w_out + b_out


if __name__ == "__main__":
    # Small shapes consistent with a DQN forward pass.
    batch = 8
    input_size = 16
    hidden_size = 32
    output_size = 4
    hidden_layers = 2

    key = jax.random.PRNGKey(0)
    k_x, k_p = jax.random.split(key)
    x = jax.random.normal(k_x, (batch, input_size), dtype=jnp.float32)
    params = init_params(k_p, input_size, hidden_size, output_size, hidden_layers)

    out = deep_q_forward(x, params)
    out = jax.block_until_ready(out)

    ref = reference_forward(x, params)
    assert out.shape == (batch, output_size)
    assert jnp.allclose(out, ref, atol=1e-5, rtol=1e-5)
    print("KERNEL_OK")
</pallas_src>

<mosaic_0001>
module attributes {stable_mosaic.version = 11 : i64} {
  func.func @_dqn_kernel(%arg0: i32, %arg1: memref<8x128xf32, #tpu.memory_space<vmem>>, %arg2: memref<128x128xf32, #tpu.memory_space<vmem>>, %arg3: memref<1x128xf32, #tpu.memory_space<vmem>>, %arg4: memref<2x128x128xf32, #tpu.memory_space<vmem>>, %arg5: memref<2x128xf32, #tpu.memory_space<vmem>>, %arg6: memref<128x128xf32, #tpu.memory_space<vmem>>, %arg7: memref<1x128xf32, #tpu.memory_space<vmem>>, %arg8: memref<8x128xf32, #tpu.memory_space<vmem>>) attributes {dimension_semantics = [#tpu.dimension_semantics<parallel>], iteration_bounds = array<i64: 1>, scalar_prefetch = 0 : i64, scratch_operands = 0 : i64, tpu.core_type = #tpu.core_type<tc>, window_params = [{transform_indices = @transform_0, window_bounds = array<i64: 8, 128>}, {pipeline_mode = #tpu.pipeline_mode<synchronous>, transform_indices = @transform_1, window_bounds = array<i64: 128, 128>}, {pipeline_mode = #tpu.pipeline_mode<synchronous>, transform_indices = @transform_2, window_bounds = array<i64: 1, 128>}, {pipeline_mode = #tpu.pipeline_mode<synchronous>, transform_indices = @transform_3, window_bounds = array<i64: 2, 128, 128>}, {pipeline_mode = #tpu.pipeline_mode<synchronous>, transform_indices = @transform_4, window_bounds = array<i64: 2, 128>}, {pipeline_mode = #tpu.pipeline_mode<synchronous>, transform_indices = @transform_5, window_bounds = array<i64: 128, 128>}, {pipeline_mode = #tpu.pipeline_mode<synchronous>, transform_indices = @transform_6, window_bounds = array<i64: 1, 128>}, {transform_indices = @transform_7, window_bounds = array<i64: 8, 128>}]} {
    %c0 = arith.constant 0 : index
    %c0_0 = arith.constant 0 : index
    %0 = vector.load %arg1[%c0, %c0_0] : memref<8x128xf32, #tpu.memory_space<vmem>>, vector<8x128xf32>
    %c0_1 = arith.constant 0 : index
    %c0_2 = arith.constant 0 : index
    %1 = vector.load %arg2[%c0_1, %c0_2] : memref<128x128xf32, #tpu.memory_space<vmem>>, vector<128x128xf32>
    %cst = arith.constant dense<0.000000e+00> : vector<8x128xf32>
    %2 = tpu.matmul %0, %1, %cst {dimension_numbers = #tpu.dot_dimension_numbers<[1], [0], [0], [1], [0, 0, 1, 1], [], []>} : vector<8x128xf32>, vector<128x128xf32>, vector<8x128xf32> -> vector<8x128xf32>
    %c0_3 = arith.constant 0 : index
    %c0_4 = arith.constant 0 : index
    %3 = vector.load %arg3[%c0_3, %c0_4] : memref<1x128xf32, #tpu.memory_space<vmem>>, vector<1x128xf32>
    %4 = vector.broadcast %3 : vector<1x128xf32> to vector<8x128xf32>
    %5 = arith.addf %2, %4 : vector<8x128xf32>
    %cst_5 = arith.constant 0.000000e+00 : f32
    %6 = vector.broadcast %cst_5 : f32 to vector<8x128xf32>
    %7 = arith.maximumf %5, %6 : vector<8x128xf32>
    %c0_6 = arith.constant 0 : index
    %c0_7 = arith.constant 0 : index
    %c0_8 = arith.constant 0 : index
    %8 = vector.load %arg4[%c0_6, %c0_7, %c0_8] : memref<2x128x128xf32, #tpu.memory_space<vmem>>, vector<1x128x128xf32>
    %9 = vector.shape_cast %8 : vector<1x128x128xf32> to vector<128x128xf32>
    %cst_9 = arith.constant dense<0.000000e+00> : vector<8x128xf32>
    %10 = tpu.matmul %7, %9, %cst_9 {dimension_numbers = #tpu.dot_dimension_numbers<[1], [0], [0], [1], [0, 0, 1, 1], [], []>} : vector<8x128xf32>, vector<128x128xf32>, vector<8x128xf32> -> vector<8x128xf32>
    %c0_10 = arith.constant 0 : index
    %c0_11 = arith.constant 0 : index
    %11 = vector.load %arg5[%c0_10, %c0_11] : memref<2x128xf32, #tpu.memory_space<vmem>>, vector<1x128xf32>
    %12 = vector.shape_cast %11 : vector<1x128xf32> to vector<128xf32>
    %13 = vector.shape_cast %12 : vector<128xf32> to vector<1x128xf32>
    %14 = vector.broadcast %13 : vector<1x128xf32> to vector<8x128xf32>
    %15 = arith.addf %10, %14 : vector<8x128xf32>
    %cst_12 = arith.constant 0.000000e+00 : f32
    %16 = vector.broadcast %cst_12 : f32 to vector<8x128xf32>
    %17 = arith.maximumf %15, %16 : vector<8x128xf32>
    %c1 = arith.constant 1 : index
    %c0_13 = arith.constant 0 : index
    %c0_14 = arith.constant 0 : index
    %18 = vector.load %arg4[%c1, %c0_13, %c0_14] : memref<2x128x128xf32, #tpu.memory_space<vmem>>, vector<1x128x128xf32>
    %19 = vector.shape_cast %18 : vector<1x128x128xf32> to vector<128x128xf32>
    %cst_15 = arith.constant dense<0.000000e+00> : vector<8x128xf32>
    %20 = tpu.matmul %17, %19, %cst_15 {dimension_numbers = #tpu.dot_dimension_numbers<[1], [0], [0], [1], [0, 0, 1, 1], [], []>} : vector<8x128xf32>, vector<128x128xf32>, vector<8x128xf32> -> vector<8x128xf32>
    %c1_16 = arith.constant 1 : index
    %c0_17 = arith.constant 0 : index
    %21 = vector.load %arg5[%c1_16, %c0_17] : memref<2x128xf32, #tpu.memory_space<vmem>>, vector<1x128xf32>
    %22 = vector.shape_cast %21 : vector<1x128xf32> to vector<128xf32>
    %23 = vector.shape_cast %22 : vector<128xf32> to vector<1x128xf32>
    %24 = vector.broadcast %23 : vector<1x128xf32> to vector<8x128xf32>
    %25 = arith.addf %20, %24 : vector<8x128xf32>
    %cst_18 = arith.constant 0.000000e+00 : f32
    %26 = vector.broadcast %cst_18 : f32 to vector<8x128xf32>
    %27 = arith.maximumf %25, %26 : vector<8x128xf32>
    %c0_19 = arith.constant 0 : index
    %c0_20 = arith.constant 0 : index
    %28 = vector.load %arg6[%c0_19, %c0_20] : memref<128x128xf32, #tpu.memory_space<vmem>>, vector<128x128xf32>
    %cst_21 = arith.constant dense<0.000000e+00> : vector<8x128xf32>
    %29 = tpu.matmul %27, %28, %cst_21 {dimension_numbers = #tpu.dot_dimension_numbers<[1], [0], [0], [1], [0, 0, 1, 1], [], []>} : vector<8x128xf32>, vector<128x128xf32>, vector<8x128xf32> -> vector<8x128xf32>
    %c0_22 = arith.constant 0 : index
    %c0_23 = arith.constant 0 : index
    %30 = vector.load %arg7[%c0_22, %c0_23] : memref<1x128xf32, #tpu.memory_space<vmem>>, vector<1x128xf32>
    %31 = vector.broadcast %30 : vector<1x128xf32> to vector<8x128xf32>
    %32 = arith.addf %29, %31 : vector<8x128xf32>
    %c0_24 = arith.constant 0 : index
    %c0_25 = arith.constant 0 : index
    %33 = vector.load %arg8[%c0_24, %c0_25] : memref<8x128xf32, #tpu.memory_space<vmem>>, vector<8x128xf32>
    tpu.vector_store %arg8[%c0_24, %c0_25], %32 {strides = array<i32>} : memref<8x128xf32, #tpu.memory_space<vmem>>, vector<8x128xf32>,
    return
  }
  func.func @transform_0(%arg0: i32) -> (i32, i32) {
    %c0_i32 = arith.constant 0 : i32
    %c0_i32_0 = arith.constant 0 : i32
    return %arg0, %c0_i32 : i32, i32
  }
  func.func @transform_1(%arg0: i32) -> (i32, i32) {
    %c0_i32 = arith.constant 0 : i32
    %c0_i32_0 = arith.constant 0 : i32
    %c0_i32_1 = arith.constant 0 : i32
    return %c0_i32, %c0_i32_0 : i32, i32
  }
  func.func @transform_2(%arg0: i32) -> (i32, i32) {
    %c0_i32 = arith.constant 0 : i32
    %c0_i32_0 = arith.constant 0 : i32
    %c0_i32_1 = arith.constant 0 : i32
    return %c0_i32, %c0_i32_0 : i32, i32
  }
  func.func @transform_3(%arg0: i32) -> (i32, i32, i32) {
    %c0_i32 = arith.constant 0 : i32
    %c0_i32_0 = arith.constant 0 : i32
    %c0_i32_1 = arith.constant 0 : i32
    %c0_i32_2 = arith.constant 0 : i32
    return %c0_i32, %c0_i32_0, %c0_i32_1 : i32, i32, i32
  }
  func.func @transform_4(%arg0: i32) -> (i32, i32) {
    %c0_i32 = arith.constant 0 : i32
    %c0_i32_0 = arith.constant 0 : i32
    %c0_i32_1 = arith.constant 0 : i32
    return %c0_i32, %c0_i32_0 : i32, i32
  }
  func.func @transform_5(%arg0: i32) -> (i32, i32) {
    %c0_i32 = arith.constant 0 : i32
    %c0_i32_0 = arith.constant 0 : i32
    %c0_i32_1 = arith.constant 0 : i32
    return %c0_i32, %c0_i32_0 : i32, i32
  }
  func.func @transform_6(%arg0: i32) -> (i32, i32) {
    %c0_i32 = arith.constant 0 : i32
    %c0_i32_0 = arith.constant 0 : i32
    %c0_i32_1 = arith.constant 0 : i32
    return %c0_i32, %c0_i32_0 : i32, i32
  }
  func.func @transform_7(%arg0: i32) -> (i32, i32) {
    %c0_i32 = arith.constant 0 : i32
    %c0_i32_0 = arith.constant 0 : i32
    return %arg0, %c0_i32 : i32, i32
  }
}

</mosaic_0001>

<llo_original>
// kernel: tpu_custom_call.1
$region0: #{tpu_custom_call.1}
  #allocation0 [shape = 'u32[]', space=smem, size = 0x4, offset = 0x4, fixed_abs, tag = 'smem constant byte address 0x4 - core index']
  #allocation1 [shape = 'u32[144,128]{1,0:T(1,128)}', space=vmem, size = 0x12000, scoped, tag = 'internal scratch']
  %s0 = inlined_call_operand.hbm [shape: f32[8,128], index: 0, kind: input, shape index: {}]
  %s1 = inlined_call_operand.hbm [shape: f32[128,128], index: 1, kind: input, shape index: {}]
  %s2 = inlined_call_operand.vmem [shape: f32[1,128], index: 2, kind: input, shape index: {}]
  %s3 = inlined_call_operand.hbm [shape: f32[2,128,128], index: 3, kind: input, shape index: {}]
  %s4 = inlined_call_operand.vmem [shape: f32[2,128], index: 4, kind: input, shape index: {}]
  %s5 = inlined_call_operand.hbm [shape: f32[128,128], index: 5, kind: input, shape index: {}]
  %s6 = inlined_call_operand.vmem [shape: f32[1,128], index: 6, kind: input, shape index: {}]
  %s7 = inlined_call_operand.hbm [shape: f32[8,128], index: 7, kind: output, shape index: {}]
  %s8 = sld [smem:[#allocation0]]
  $region54: #{tpu_custom_call.1} parent=0
    _
  %s10 = ssub.s32 1, %s8
  %s11 = scalar_select 0, %s10, %s8
  $region1: #{tpu_custom_call.1} parent=0
    #allocation2 [shape = 'u8[4096]{0}', space=vmem, size = 0x1000, scoped, tag = 'input window, operand 0, single buffered']
    #allocation3 [shape = 's32[1]{0}', space=sflag, size = 0x4, scoped, tag = 'scoped memory for tpu_custom_call.1']
    #allocation4 [shape = 's32[1]{0}', space=sflag, size = 0x4, scoped, tag = 'scoped memory for tpu_custom_call.1']
    #allocation5 [shape = 'u8[65536]{0}', space=vmem, size = 0x10000, scoped, tag = 'input window, operand 1, single buffered']
    #allocation6 [shape = 's32[1]{0}', space=sflag, size = 0x4, scoped, tag = 'scoped memory for tpu_custom_call.1']
    #allocation7 [shape = 'u8[131072]{0}', space=vmem, size = 0x20000, scoped, tag = 'input window, operand 3, single buffered']
    #allocation8 [shape = 'u8[65536]{0}', space=vmem, size = 0x10000, scoped, tag = 'input window, operand 5, single buffered']
    #allocation9 [shape = 's32[1]{0}', space=sflag, size = 0x4, scoped, tag = 'scoped memory for tpu_custom_call.1']
    #allocation10 [shape = 'u8[4096]{0}', space=vmem, size = 0x1000, scoped, tag = 'output window, operand 0, single buffered']
    %12 = vsyncpa [#allocation3], 0
    %13 = vsyncpa [#allocation6], 0
    %14 = vsyncpa [#allocation9], 0
    %15 = vsyncpa [#allocation4], 0
    // Predicated region
    $region2: #{tpu_custom_call.1} parent=1 // pred_check
      _
    $region3: #{tpu_custom_call.1} parent=1 // pred_check_branch
      %17 = sbr.rel (0) target = $region5
    $region4: #{tpu_custom_call.1} parent=1 // pred_region
      %s19 = ssub.s32 128, 128
      %20 = vsyncadd [#allocation3], %s19
      %s22 = sshll.u32 [#allocation2], 4
      %s23 = int_to_ptr.vmem [resolvable:$true] %s22
      %25 = dma.hbm_to_vmem [thread:$0]  %s0, 128, %s23, [#allocation3]
    $region5: #{tpu_custom_call.1} parent=1 // pred_fallthru
      _
    // Predicated region
    $region6: #{tpu_custom_call.1} parent=1 // pred_check
      _
    $region7: #{tpu_custom_call.1} parent=1 // pred_check_branch
      %27 = sbr.rel (0) target = $region9
    $region8: #{tpu_custom_call.1} parent=1 // pred_region
      %s29 = ssub.s32 2048, 2048
      %30 = vsyncadd [#allocation6], %s29
      %s31 = sshll.u32 [#allocation5], 4
      %s32 = int_to_ptr.vmem [resolvable:$true] %s31
      %37 = dma.hbm_to_vmem [thread:$0]  %s1, 2048, %s32, [#allocation6], 128, 128, 8
    $region9: #{tpu_custom_call.1} parent=1 // pred_fallthru
      _
    // Predicated region
    $region10: #{tpu_custom_call.1} parent=1 // pred_check
      _
    $region11: #{tpu_custom_call.1} parent=1 // pred_check_branch
      %39 = sbr.rel (0) target = $region13
    $region12: #{tpu_custom_call.1} parent=1 // pred_region
      _
    $region13: #{tpu_custom_call.1} parent=1 // pred_fallthru
      _
    // Predicated region
    $region14: #{tpu_custom_call.1} parent=1 // pred_check
      _
    $region15: #{tpu_custom_call.1} parent=1 // pred_check_branch
      %41 = sbr.rel (0) target = $region17
    $region16: #{tpu_custom_call.1} parent=1 // pred_region
      %s43 = ssub.s32 4096, 4096
      %44 = vsyncadd [#allocation6], %s43
      %s45 = sshll.u32 [#allocation7], 4
      %s46 = int_to_ptr.vmem [resolvable:$true] %s45
      %51 = dma.hbm_to_vmem [thread:$0]  %s3, 4096, %s46, [#allocation6], 128, 128, 8
    $region17: #{tpu_custom_call.1} parent=1 // pred_fallthru
      _
    // Predicated region
    $region18: #{tpu_custom_call.1} parent=1 // pred_check
      _
    $region19: #{tpu_custom_call.1} parent=1 // pred_check_branch
      %53 = sbr.rel (0) target = $region21
    $region20: #{tpu_custom_call.1} parent=1 // pred_region
      _
    $region21: #{tpu_custom_call.1} parent=1 // pred_fallthru
      _
    // Predicated region
    $region22: #{tpu_custom_call.1} parent=1 // pred_check
      _
    $region23: #{tpu_custom_call.1} parent=1 // pred_check_branch
      %55 = sbr.rel (0) target = $region25
    $region24: #{tpu_custom_call.1} parent=1 // pred_region
      %s57 = ssub.s32 2048, 2048
      %58 = vsyncadd [#allocation9], %s57
      %s59 = sshll.u32 [#allocation8], 4
      %s60 = int_to_ptr.vmem [resolvable:$true] %s59
      %65 = dma.hbm_to_vmem [thread:$0]  %s5, 2048, %s60, [#allocation9], 128, 128, 8
    $region25: #{tpu_custom_call.1} parent=1 // pred_fallthru
      _
    // Predicated region
    $region26: #{tpu_custom_call.1} parent=1 // pred_check
      _
    $region27: #{tpu_custom_call.1} parent=1 // pred_check_branch
      %67 = sbr.rel (0) target = $region29
    $region28: #{tpu_custom_call.1} parent=1 // pred_region
      _
    $region29: #{tpu_custom_call.1} parent=1 // pred_fallthru
      _
    // Predicated region
    $region30: #{tpu_custom_call.1} parent=1 // pred_check
      _
    $region31: #{tpu_custom_call.1} parent=1 // pred_check_branch
      %69 = sbr.rel (0) target = $region33
    $region32: #{tpu_custom_call.1} parent=1 // pred_region
      %70 = dma.done [#allocation3], 128
    $region33: #{tpu_custom_call.1} parent=1 // pred_fallthru
      _
    // Predicated region
    $region34: #{tpu_custom_call.1} parent=1 // pred_check
      _
    $region35: #{tpu_custom_call.1} parent=1 // pred_check_branch
      %72 = sbr.rel (0) target = $region37
    $region36: #{tpu_custom_call.1} parent=1 // pred_region
      %73 = dma.done [#allocation6], 2048
    $region37: #{tpu_custom_call.1} parent=1 // pred_fallthru
      _
    // Predicated region
    $region38: #{tpu_custom_call.1} parent=1 // pred_check
      _
    $region39: #{tpu_custom_call.1} parent=1 // pred_check_branch
      %75 = sbr.rel (0) target = $region41
    $region40: #{tpu_custom_call.1} parent=1 // pred_region
      %76 = dma.done [#allocation6], 4096
    $region41: #{tpu_custom_call.1} parent=1 // pred_fallthru
      _
    // Predicated region
    $region42: #{tpu_custom_call.1} parent=1 // pred_check
      _
    $region43: #{tpu_custom_call.1} parent=1 // pred_check_branch
      %78 = sbr.rel (0) target = $region45
    $region44: #{tpu_custom_call.1} parent=1 // pred_region
      %79 = dma.done [#allocation9], 2048
    $region45: #{tpu_custom_call.1} parent=1 // pred_fallthru
      _
    %v80 = vld [vmem:[#allocation2] sm:$0xff]
    %v81 = vld [vmem:[#allocation5] sm:$0xff]
    %v82 = vld [vmem:[#allocation5 + $0x8] sm:$0xff]
    %v83 = vld [vmem:[#allocation5 + $0x10] sm:$0xff]
    %v84 = vld [vmem:[#allocation5 + $0x18] sm:$0xff]
    %v85 = vld [vmem:[#allocation5 + $0x20] sm:$0xff]
    %v86 = vld [vmem:[#allocation5 + $0x28] sm:$0xff]
    %v87 = vld [vmem:[#allocation5 + $0x30] sm:$0xff]
    %v88 = vld [vmem:[#allocation5 + $0x38] sm:$0xff]
    %v89 = vld [vmem:[#allocation5 + $0x40] sm:$0xff]
    %v90 = vld [vmem:[#allocation5 + $0x48] sm:$0xff]
    %v91 = vld [vmem:[#allocation5 + $0x50] sm:$0xff]
    %v92 = vld [vmem:[#allocation5 + $0x58] sm:$0xff]
    %v93 = vld [vmem:[#allocation5 + $0x60] sm:$0xff]
    %v94 = vld [vmem:[#allocation5 + $0x68] sm:$0xff]
    %v95 = vld [vmem:[#allocation5 + $0x70] sm:$0xff]
    %v96 = vld [vmem:[#allocation5 + $0x78] sm:$0xff]
    %v97 = vld [vmem:[%s2] sm:$0x1]
    %v99 = vlaneseq
    %v100 = vshrl.u32 %v99, 7
    %v101 = vsub.s32 0, %v100
    %v102 = vrot.slane %v97, %v101
    %104 = vmatprep.subr.mxu0 0.0
    %105 = vmatpush1.msra.mxu0 %v81
    %106 = vmatprep.subr.mxu0 0.0
    %107 = vmatpush1.msra.mxu0 %v82
    %108 = vmatprep.subr.mxu0 0.0
    %109 = vmatpush1.msra.mxu0 %v83
    %110 = vmatprep.subr.mxu0 0.0
    %111 = vmatpush1.msra.mxu0 %v84
    %112 = vmatprep.subr.mxu0 0.0
    %113 = vmatpush1.msra.mxu0 %v85
    %114 = vmatprep.subr.mxu0 0.0
    %115 = vmatpush1.msra.mxu0 %v86
    %116 = vmatprep.subr.mxu0 0.0
    %117 = vmatpush1.msra.mxu0 %v87
    %118 = vmatprep.subr.mxu0 0.0
    %119 = vmatpush1.msra.mxu0 %v88
    %120 = vmatprep.subr.mxu0 0.0
    %121 = vmatpush1.msra.mxu0 %v89
    %122 = vmatprep.subr.mxu0 0.0
    %123 = vmatpush1.msra.mxu0 %v90
    %124 = vmatprep.subr.mxu0 0.0
    %125 = vmatpush1.msra.mxu0 %v91
    %126 = vmatprep.subr.mxu0 0.0
    %127 = vmatpush1.msra.mxu0 %v92
    %128 = vmatprep.subr.mxu0 0.0
    %129 = vmatpush1.msra.mxu0 %v93
    %130 = vmatprep.subr.mxu0 0.0
    %131 = vmatpush1.msra.mxu0 %v94
    %132 = vmatprep.subr.mxu0 0.0
    %133 = vmatpush1.msra.mxu0 %v95
    %134 = vmatprep.subr.mxu0 0.0
    %135 = vmatpush1.msra.mxu0 %v96
    %136 = vmatprep.subr.mxu0 0.0
    %137 = vmatpush1.msra.mxu0 0.0
    %138 = vmatprep.subr.mxu0 0.0
    %139 = vmatpush1.msra.mxu0 0.0
    %140 = vmatprep.subr.mxu0 0.0
    %141 = vmatpush1.msra.mxu0 0.0
    %142 = vmatprep.subr.mxu0 0.0
    %143 = vmatpush1.msra.mxu0 0.0
    %144 = vmatprep.subr.mxu0 0.0
    %145 = vmatpush1.msra.mxu0 0.0
    %146 = vmatprep.subr.mxu0 0.0
    %147 = vmatpush1.msra.mxu0 0.0
    %148 = vmatprep.subr.mxu0 0.0
    %149 = vmatpush1.msra.mxu0 0.0
    %150 = vmatprep.subr.mxu0 0.0
    %151 = vmatpush1.msra.mxu0 0.0
    %152 = vmatprep.subr.mxu0 0.0
    %153 = vmatpush1.msra.mxu0 0.0
    %154 = vmatprep.subr.mxu0 0.0
    %155 = vmatpush1.msra.mxu0 0.0
    %156 = vmatprep.subr.mxu0 0.0
    %157 = vmatpush1.msra.mxu0 0.0
    %158 = vmatprep.subr.mxu0 0.0
    %159 = vmatpush1.msra.mxu0 0.0
    %160 = vmatprep.subr.mxu0 0.0
    %161 = vmatpush1.msra.mxu0 0.0
    %162 = vmatprep.subr.mxu0 0.0
    %163 = vmatpush1.msra.mxu0 0.0
    %164 = vmatprep.subr.mxu0 0.0
    %165 = vmatpush1.msra.mxu0 0.0
    %166 = vmatprep.subr.mxu0 0.0
    %167 = vmatpush1.msra.mxu0 0.0
    %168 = vmatprep.mubr.f32.mxu0 0.0
    %169 = vmatmul.mubr.f32.gmra.mrb[0].mxu0 %v80
    %v170 = vpop.f32.mrb[0].mxu0
    %v171 = vadd.f32 %v102, %v170
    %v172 = vpop.f32.mrb[0].mxu0
    %173 = vdwg.mxu0
    %v174 = vmax.f32 %v171, 0.0
    %v175 = vld [vmem:[#allocation7] sm:$0xff]
    %v176 = vld [vmem:[#allocation7 + $0x8] sm:$0xff]
    %v177 = vld [vmem:[#allocation7 + $0x10] sm:$0xff]
    %v178 = vld [vmem:[#allocation7 + $0x18] sm:$0xff]
    %v179 = vld [vmem:[#allocation7 + $0x20] sm:$0xff]
    %v180 = vld [vmem:[#allocation7 + $0x28] sm:$0xff]
    %v181 = vld [vmem:[#allocation7 + $0x30] sm:$0xff]
    %v182 = vld [vmem:[#allocation7 + $0x38] sm:$0xff]
    %v183 = vld [vmem:[#allocation7 + $0x40] sm:$0xff]
    %v184 = vld [vmem:[#allocation7 + $0x48] sm:$0xff]
    %v185 = vld [vmem:[#allocation7 + $0x50] sm:$0xff]
    %v186 = vld [vmem:[#allocation7 + $0x58] sm:$0xff]
    %v187 = vld [vmem:[#allocation7 + $0x60] sm:$0xff]
    %v188 = vld [vmem:[#allocation7 + $0x68] sm:$0xff]
    %v189 = vld [vmem:[#allocation7 + $0x70] sm:$0xff]
    %v190 = vld [vmem:[#allocation7 + $0x78] sm:$0xff]
    %v191 = vld [vmem:[%s4] sm:$0x1]
    %v192 = vlaneseq
    %v193 = vshrl.u32 %v192, 7
    %v194 = vsub.s32 0, %v193
    %v195 = vrot.slane %v191, %v194
    %196 = vmatprep.subr.mxu0 0.0
    %197 = vmatpush1.msra.mxu0 %v175
    %198 = vmatprep.subr.mxu0 0.0
    %199 = vmatpush1.msra.mxu0 %v176
    %200 = vmatprep.subr.mxu0 0.0
    %201 = vmatpush1.msra.mxu0 %v177
    %202 = vmatprep.subr.mxu0 0.0
    %203 = vmatpush1.msra.mxu0 %v178
    %204 = vmatprep.subr.mxu0 0.0
    %205 = vmatpush1.msra.mxu0 %v179
    %206 = vmatprep.subr.mxu0 0.0
    %207 = vmatpush1.msra.mxu0 %v180
    %208 = vmatprep.subr.mxu0 0.0
    %209 = vmatpush1.msra.mxu0 %v181
    %210 = vmatprep.subr.mxu0 0.0
    %211 = vmatpush1.msra.mxu0 %v182
    %212 = vmatprep.subr.mxu0 0.0
    %213 = vmatpush1.msra.mxu0 %v183
    %214 = vmatprep.subr.mxu0 0.0
    %215 = vmatpush1.msra.mxu0 %v184
    %216 = vmatprep.subr.mxu0 0.0
    %217 = vmatpush1.msra.mxu0 %v185
    %218 = vmatprep.subr.mxu0 0.0
    %219 = vmatpush1.msra.mxu0 %v186
    %220 = vmatprep.subr.mxu0 0.0
    %221 = vmatpush1.msra.mxu0 %v187
    %222 = vmatprep.subr.mxu0 0.0
    %223 = vmatpush1.msra.mxu0 %v188
    %224 = vmatprep.subr.mxu0 0.0
    %225 = vmatpush1.msra.mxu0 %v189
    %226 = vmatprep.subr.mxu0 0.0
    %227 = vmatpush1.msra.mxu0 %v190
    %228 = vmatprep.subr.mxu0 0.0
    %229 = vmatpush1.msra.mxu0 0.0
    %230 = vmatprep.subr.mxu0 0.0
    %231 = vmatpush1.msra.mxu0 0.0
    %232 = vmatprep.subr.mxu0 0.0
    %233 = vmatpush1.msra.mxu0 0.0
    %234 = vmatprep.subr.mxu0 0.0
    %235 = vmatpush1.msra.mxu0 0.0
    %236 = vmatprep.subr.mxu0 0.0
    %237 = vmatpush1.msra.mxu0 0.0
    %238 = vmatprep.subr.mxu0 0.0
    %239 = vmatpush1.msra.mxu0 0.0
    %240 = vmatprep.subr.mxu0 0.0
    %241 = vmatpush1.msra.mxu0 0.0
    %242 = vmatprep.subr.mxu0 0.0
    %243 = vmatpush1.msra.mxu0 0.0
    %244 = vmatprep.subr.mxu0 0.0
    %245 = vmatpush1.msra.mxu0 0.0
    %246 = vmatprep.subr.mxu0 0.0
    %247 = vmatpush1.msra.mxu0 0.0
    %248 = vmatprep.subr.mxu0 0.0
    %249 = vmatpush1.msra.mxu0 0.0
    %250 = vmatprep.subr.mxu0 0.0
    %251 = vmatpush1.msra.mxu0 0.0
    %252 = vmatprep.subr.mxu0 0.0
    %253 = vmatpush1.msra.mxu0 0.0
    %254 = vmatprep.subr.mxu0 0.0
    %255 = vmatpush1.msra.mxu0 0.0
    %256 = vmatprep.subr.mxu0 0.0
    %257 = vmatpush1.msra.mxu0 0.0
    %258 = vmatprep.subr.mxu0 0.0
    %259 = vmatpush1.msra.mxu0 0.0
    %260 = vmatprep.mubr.f32.mxu0 0.0
    %261 = vmatmul.mubr.f32.gmra.mrb[0].mxu0 %v174
    %v262 = vpop.f32.mrb[0].mxu0
    %v263 = vadd.f32 %v195, %v262
    %v264 = vpop.f32.mrb[0].mxu0
    %265 = vdwg.mxu0
    %v266 = vmax.f32 %v263, 0.0
    %s267 = scalar_lea.vmem [#allocation7], 128
    %v268 = vld [vmem:[%s267] sm:$0xff]
    %v269 = vld [vmem:[%s267 + $0x8] sm:$0xff]
    %v270 = vld [vmem:[%s267 + $0x10] sm:$0xff]
    %v271 = vld [vmem:[%s267 + $0x18] sm:$0xff]
    %v272 = vld [vmem:[%s267 + $0x20] sm:$0xff]
    %v273 = vld [vmem:[%s267 + $0x28] sm:$0xff]
    %v274 = vld [vmem:[%s267 + $0x30] sm:$0xff]
    %v275 = vld [vmem:[%s267 + $0x38] sm:$0xff]
    %v276 = vld [vmem:[%s267 + $0x40] sm:$0xff]
    %v277 = vld [vmem:[%s267 + $0x48] sm:$0xff]
    %v278 = vld [vmem:[%s267 + $0x50] sm:$0xff]
    %v279 = vld [vmem:[%s267 + $0x58] sm:$0xff]
    %v280 = vld [vmem:[%s267 + $0x60] sm:$0xff]
    %v281 = vld [vmem:[%s267 + $0x68] sm:$0xff]
    %v282 = vld [vmem:[%s267 + $0x70] sm:$0xff]
    %v283 = vld [vmem:[%s267 + $0x78] sm:$0xff]
    %v284 = vld [vmem:[%s4 + $0x1] sm:$0x1]
    %v285 = vlaneseq
    %v286 = vshrl.u32 %v285, 7
    %v287 = vsub.s32 0, %v286
    %v288 = vrot.slane %v284, %v287
    %289 = vmatprep.subr.mxu0 0.0
    %290 = vmatpush1.msra.mxu0 %v268
    %291 = vmatprep.subr.mxu0 0.0
    %292 = vmatpush1.msra.mxu0 %v269
    %293 = vmatprep.subr.mxu0 0.0
    %294 = vmatpush1.msra.mxu0 %v270
    %295 = vmatprep.subr.mxu0 0.0
    %296 = vmatpush1.msra.mxu0 %v271
    %297 = vmatprep.subr.mxu0 0.0
    %298 = vmatpush1.msra.mxu0 %v272
    %299 = vmatprep.subr.mxu0 0.0
    %300 = vmatpush1.msra.mxu0 %v273
    %301 = vmatprep.subr.mxu0 0.0
    %302 = vmatpush1.msra.mxu0 %v274
    %303 = vmatprep.subr.mxu0 0.0
    %304 = vmatpush1.msra.mxu0 %v275
    %305 = vmatprep.subr.mxu0 0.0
    %306 = vmatpush1.msra.mxu0 %v276
    %307 = vmatprep.subr.mxu0 0.0
    %308 = vmatpush1.msra.mxu0 %v277
    %309 = vmatprep.subr.mxu0 0.0
    %310 = vmatpush1.msra.mxu0 %v278
    %311 = vmatprep.subr.mxu0 0.0
    %312 = vmatpush1.msra.mxu0 %v279
    %313 = vmatprep.subr.mxu0 0.0
    %314 = vmatpush1.msra.mxu0 %v280
    %315 = vmatprep.subr.mxu0 0.0
    %316 = vmatpush1.msra.mxu0 %v281
    %317 = vmatprep.subr.mxu0 0.0
    %318 = vmatpush1.msra.mxu0 %v282
    %319 = vmatprep.subr.mxu0 0.0
    %320 = vmatpush1.msra.mxu0 %v283
    %321 = vmatprep.subr.mxu0 0.0
    %322 = vmatpush1.msra.mxu0 0.0
    %323 = vmatprep.subr.mxu0 0.0
    %324 = vmatpush1.msra.mxu0 0.0
    %325 = vmatprep.subr.mxu0 0.0
    %326 = vmatpush1.msra.mxu0 0.0
    %327 = vmatprep.subr.mxu0 0.0
    %328 = vmatpush1.msra.mxu0 0.0
    %329 = vmatprep.subr.mxu0 0.0
    %330 = vmatpush1.msra.mxu0 0.0
    %331 = vmatprep.subr.mxu0 0.0
    %332 = vmatpush1.msra.mxu0 0.0
    %333 = vmatprep.subr.mxu0 0.0
    %334 = vmatpush1.msra.mxu0 0.0
    %335 = vmatprep.subr.mxu0 0.0
    %336 = vmatpush1.msra.mxu0 0.0
    %337 = vmatprep.subr.mxu0 0.0
    %338 = vmatpush1.msra.mxu0 0.0
    %339 = vmatprep.subr.mxu0 0.0
    %340 = vmatpush1.msra.mxu0 0.0
    %341 = vmatprep.subr.mxu0 0.0
    %342 = vmatpush1.msra.mxu0 0.0
    %343 = vmatprep.subr.mxu0 0.0
    %344 = vmatpush1.msra.mxu0 0.0
    %345 = vmatprep.subr.mxu0 0.0
    %346 = vmatpush1.msra.mxu0 0.0
    %347 = vmatprep.subr.mxu0 0.0
    %348 = vmatpush1.msra.mxu0 0.0
    %349 = vmatprep.subr.mxu0 0.0
    %350 = vmatpush1.msra.mxu0 0.0
    %351 = vmatprep.subr.mxu0 0.0
    %352 = vmatpush1.msra.mxu0 0.0
    %353 = vmatprep.mubr.f32.mxu0 0.0
    %354 = vmatmul.mubr.f32.gmra.mrb[0].mxu0 %v266
    %v355 = vpop.f32.mrb[0].mxu0
    %v356 = vadd.f32 %v288, %v355
    %v357 = vpop.f32.mrb[0].mxu0
    %358 = vdwg.mxu0
    %v359 = vmax.f32 %v356, 0.0
    %v360 = vld [vmem:[#allocation8] sm:$0xff]
    %v361 = vld [vmem:[#allocation8 + $0x8] sm:$0xff]
    %v362 = vld [vmem:[#allocation8 + $0x10] sm:$0xff]
    %v363 = vld [vmem:[#allocation8 + $0x18] sm:$0xff]
    %v364 = vld [vmem:[#allocation8 + $0x20] sm:$0xff]
    %v365 = vld [vmem:[#allocation8 + $0x28] sm:$0xff]
    %v366 = vld [vmem:[#allocation8 + $0x30] sm:$0xff]
    %v367 = vld [vmem:[#allocation8 + $0x38] sm:$0xff]
    %v368 = vld [vmem:[#allocation8 + $0x40] sm:$0xff]
    %v369 = vld [vmem:[#allocation8 + $0x48] sm:$0xff]
    %v370 = vld [vmem:[#allocation8 + $0x50] sm:$0xff]
    %v371 = vld [vmem:[#allocation8 + $0x58] sm:$0xff]
    %v372 = vld [vmem:[#allocation8 + $0x60] sm:$0xff]
    %v373 = vld [vmem:[#allocation8 + $0x68] sm:$0xff]
    %v374 = vld [vmem:[#allocation8 + $0x70] sm:$0xff]
    %v375 = vld [vmem:[#allocation8 + $0x78] sm:$0xff]
    %v376 = vld [vmem:[%s6] sm:$0x1]
    %v378 = vlaneseq
    %v379 = vshrl.u32 %v378, 7
    %v380 = vsub.s32 0, %v379
    %v381 = vrot.slane %v376, %v380
    %383 = vmatprep.subr.mxu0 0.0
    %384 = vmatpush1.msra.mxu0 %v360
    %385 = vmatprep.subr.mxu0 0.0
    %386 = vmatpush1.msra.mxu0 %v361
    %387 = vmatprep.subr.mxu0 0.0
    %388 = vmatpush1.msra.mxu0 %v362
    %389 = vmatprep.subr.mxu0 0.0
    %390 = vmatpush1.msra.mxu0 %v363
    %391 = vmatprep.subr.mxu0 0.0
    %392 = vmatpush1.msra.mxu0 %v364
    %393 = vmatprep.subr.mxu0 0.0
    %394 = vmatpush1.msra.mxu0 %v365
    %395 = vmatprep.subr.mxu0 0.0
    %396 = vmatpush1.msra.mxu0 %v366
    %397 = vmatprep.subr.mxu0 0.0
    %398 = vmatpush1.msra.mxu0 %v367
    %399 = vmatprep.subr.mxu0 0.0
    %400 = vmatpush1.msra.mxu0 %v368
    %401 = vmatprep.subr.mxu0 0.0
    %402 = vmatpush1.msra.mxu0 %v369
    %403 = vmatprep.subr.mxu0 0.0
    %404 = vmatpush1.msra.mxu0 %v370
    %405 = vmatprep.subr.mxu0 0.0
    %406 = vmatpush1.msra.mxu0 %v371
    %407 = vmatprep.subr.mxu0 0.0
    %408 = vmatpush1.msra.mxu0 %v372
    %409 = vmatprep.subr.mxu0 0.0
    %410 = vmatpush1.msra.mxu0 %v373
    %411 = vmatprep.subr.mxu0 0.0
    %412 = vmatpush1.msra.mxu0 %v374
    %413 = vmatprep.subr.mxu0 0.0
    %414 = vmatpush1.msra.mxu0 %v375
    %415 = vmatprep.subr.mxu0 0.0
    %416 = vmatpush1.msra.mxu0 0.0
    %417 = vmatprep.subr.mxu0 0.0
    %418 = vmatpush1.msra.mxu0 0.0
    %419 = vmatprep.subr.mxu0 0.0
    %420 = vmatpush1.msra.mxu0 0.0
    %421 = vmatprep.subr.mxu0 0.0
    %422 = vmatpush1.msra.mxu0 0.0
    %423 = vmatprep.subr.mxu0 0.0
    %424 = vmatpush1.msra.mxu0 0.0
    %425 = vmatprep.subr.mxu0 0.0
    %426 = vmatpush1.msra.mxu0 0.0
    %427 = vmatprep.subr.mxu0 0.0
    %428 = vmatpush1.msra.mxu0 0.0
    %429 = vmatprep.subr.mxu0 0.0
    %430 = vmatpush1.msra.mxu0 0.0
    %431 = vmatprep.subr.mxu0 0.0
    %432 = vmatpush1.msra.mxu0 0.0
    %433 = vmatprep.subr.mxu0 0.0
    %434 = vmatpush1.msra.mxu0 0.0
    %435 = vmatprep.subr.mxu0 0.0
    %436 = vmatpush1.msra.mxu0 0.0
    %437 = vmatprep.subr.mxu0 0.0
    %438 = vmatpush1.msra.mxu0 0.0
    %439 = vmatprep.subr.mxu0 0.0
    %440 = vmatpush1.msra.mxu0 0.0
    %441 = vmatprep.subr.mxu0 0.0
    %442 = vmatpush1.msra.mxu0 0.0
    %443 = vmatprep.subr.mxu0 0.0
    %444 = vmatpush1.msra.mxu0 0.0
    %445 = vmatprep.subr.mxu0 0.0
    %446 = vmatpush1.msra.mxu0 0.0
    %447 = vmatprep.mubr.f32.mxu0 0.0
    %448 = vmatmul.mubr.f32.gmra.mrb[0].mxu0 %v359
    %v449 = vpop.f32.mrb[0].mxu0
    %v450 = vadd.f32 %v381, %v449
    %v451 = vpop.f32.mrb[0].mxu0
    %452 = vdwg.mxu0
    %453 = vst [vmem:[#allocation10] sm:$0xff] %v450
    // Predicated region
    $region46: #{tpu_custom_call.1} parent=1 // pred_check
      _
    $region47: #{tpu_custom_call.1} parent=1 // pred_check_branch
      %455 = sbr.rel (0) target = $region49
    $region48: #{tpu_custom_call.1} parent=1 // pred_region
      %s457 = ssub.s32 128, 128
      %458 = vsyncadd [#allocation4], %s457
      %s460 = sshll.u32 [#allocation10], 4
      %s461 = int_to_ptr.vmem [resolvable:$true] %s460
      %463 = dma.vmem_to_hbm [thread:$0]  %s461, 128, %s7, [#allocation4]
    $region49: #{tpu_custom_call.1} parent=1 // pred_fallthru
      _
    // Predicated region
    $region50: #{tpu_custom_call.1} parent=1 // pred_check
      _
    $region51: #{tpu_custom_call.1} parent=1 // pred_check_branch
      %465 = sbr.rel (0) target = $region53
    $region52: #{tpu_custom_call.1} parent=1 // pred_region
      %466 = dma.done [#allocation4], 128
    $region53: #{tpu_custom_call.1} parent=1 // pred_fallthru
      _
    %467 = vsyncpa [#allocation3], 1
    %468 = vsyncpa [#allocation6], 1
    %469 = vsyncpa [#allocation9], 1
    %470 = vsyncpa [#allocation4], 1

</llo_original>
